<compile_context>
chip_gen: v6e
topology: v6e:2x2x1
jax: 0.10.0
libtpu: 0.0.40
codegen_flags: <defaults>
</compile_context>

<pallas_src>
import jax
import jax.numpy as jnp
from jax.experimental import pallas as pl
from jax.experimental.pallas import tpu as pltpu

LANES = 384  # 3 * 128: one lane-row holds exactly 128 whole (x, y, z) points.


def _cdiv(a, b):
    return (a + b - 1) // b


def _round_up(a, b):
    return _cdiv(a, b) * b


# ----------------------------------------------------------------------------
# se3 glue (parameter -> R, T).  12 scalars of work — plain JAX, not a kernel.
# ----------------------------------------------------------------------------
def _skew(w):
    wx, wy, wz = w[0], w[1], w[2]
    z = jnp.zeros((), dtype=w.dtype)
    return jnp.array([[z, -wz, wy],
                      [wz, z, -wx],
                      [-wy, wx, z]], dtype=w.dtype)


def se3_exp3(params):
    """params: (6,) twist [w, v] -> (R (3,3), T (3,))."""
    w = params[:3]
    v = params[3:]
    theta = jnp.linalg.norm(w)
    small = theta < 1e-6
    st = jnp.where(small, 1.0, theta)            # safe theta for division
    A = jnp.where(small, 1.0, jnp.sin(st) / st)
    B = jnp.where(small, 0.5, (1.0 - jnp.cos(st)) / (st * st))
    C = jnp.where(small, 1.0 / 6.0, (st - jnp.sin(st)) / (st * st * st))
    K = _skew(w)
    K2 = K @ K
    I = jnp.eye(3, dtype=params.dtype)
    R = I + A * K + B * K2
    V = I + B * K + C * K2
    T = V @ v
    return R, T
    # TODO(synk): if a backward pass is ever added, switch the small-angle
    # branches to the double-where trick to avoid NaN gradients at theta->0.


# ----------------------------------------------------------------------------
# Coefficient planes for the interleaved-layout transform.
# For flat index i with c = i % 3 (x/y/z), the transform is
#   out[i] = A0[c]*x[i-2] + A1[c]*x[i-1] + A2[c]*x[i] + A3[c]*x[i+1]
#          + A4[c]*x[i+2] + T[c]
# These 6 coefficient vectors are periodic with period 3, so one (6, 384)
# table covers a whole lane-row.  Computed once in plain JAX (tiny).
# ----------------------------------------------------------------------------
def _coef_planes(R, T, lanes=LANES):
    c = jnp.arange(lanes) % 3
    is0 = c == 0
    is1 = c == 1
    is2 = c == 2
    a0 = jnp.where(is2, R[0, 2], 0.0)
    a1 = jnp.where(is1, R[0, 1], jnp.where(is2, R[1, 2], 0.0))
    a2 = jnp.where(is0, R[0, 0], jnp.where(is1, R[1, 1], R[2, 2]))
    a3 = jnp.where(is0, R[1, 0], jnp.where(is1, R[2, 1], 0.0))
    a4 = jnp.where(is0, R[2, 0], 0.0)
    ab = T[c]
    return jnp.stack([a0, a1, a2, a3, a4, ab], axis=0).astype(jnp.float32)


# ----------------------------------------------------------------------------
# Pallas kernel.
#   coef_ref : (6, 384)      coefficient planes (A0..A4, bias)
#   pts_ref  : (ts, 384)     point rows   (natural interleaved x,y,z layout)
#   nbr_ref  : (3*ts, 384)   neighbor rows (same layout)
#   out_*    : same shapes as the inputs, written in the same layout
# The rolls wrap within each 384-lane row; the wrapped lanes always carry a
# zero coefficient, so wraparound never leaks garbage.
# ----------------------------------------------------------------------------
def _rigid_kernel(coef_ref, pts_ref, nbr_ref, out_p_ref, out_n_ref):
    a0 = coef_ref[0:1, :]
    a1 = coef_ref[1:2, :]
    a2 = coef_ref[2:3, :]
    a3 = coef_ref[3:4, :]
    a4 = coef_ref[4:5, :]
    ab = coef_ref[5:6, :]

    def transform(x):
        xm1 = pltpu.roll(x, 1, 1)            # x[p-1]
        xm2 = pltpu.roll(x, 2, 1)            # x[p-2]
        xp1 = pltpu.roll(x, LANES - 1, 1)    # x[p+1]
        xp2 = pltpu.roll(x, LANES - 2, 1)    # x[p+2]
        return a0 * xm2 + a1 * xm1 + a2 * x + a3 * xp1 + a4 * xp2 + ab

    out_p_ref[...] = transform(pts_ref[...])
    out_n_ref[...] = transform(nbr_ref[...])


def _tile_rows(rp):
    """Rows of the point tile: <=128 rows (~1.5 MiB in+out per step across both
    arrays) and >=2 grid steps whenever possible (megacore on v7x)."""
    if rp <= 8:
        return rp
    return min(128, _round_up(_cdiv(rp, 2), 8))


# ----------------------------------------------------------------------------
# Module-equivalent forward
# ----------------------------------------------------------------------------
def reconstruction_point_forward(params, points, points_neighbors):
    """
    params:            (6,) se3 twist parameters
    points:            (B, N, 3)
    points_neighbors:  (B, 3N, 3)   (3 neighbors per point)
    returns: (update_points (B*N, 3), neighbors (B*N, 9))
    """
    B, N, _ = points.shape
    if points_neighbors.shape[:2] != (B, 3 * N):
        raise ValueError("points_neighbors must have shape (B, 3N, 3)")

    R, T = se3_exp3(params.astype(jnp.float32))
    coef = _coef_planes(R, T)

    Lp = B * N * 3
    Ln = B * (3 * N) * 3
    rp = _cdiv(Lp, LANES)
    rn = 3 * rp                               # keep neighbors == exactly 3x rows

    # Free, contiguous reshapes (pad only when the flat length isn't a
    # multiple of 384; common point counts need no pad at all).
    pts_flat = points.reshape(-1).astype(jnp.float32)
    nbr_flat = points_neighbors.reshape(-1).astype(jnp.float32)
    if rp * LANES != Lp:
        pts_flat = jnp.pad(pts_flat, (0, rp * LANES - Lp))
    if rn * LANES != Ln:
        nbr_flat = jnp.pad(nbr_flat, (0, rn * LANES - Ln))
    pts2d = pts_flat.reshape(rp, LANES)
    nbr2d = nbr_flat.reshape(rn, LANES)

    ts = _tile_rows(rp)
    grid = (_cdiv(rp, ts),)

    out_p2d, out_n2d = pl.pallas_call(
        _rigid_kernel,
        out_shape=(
            jax.ShapeDtypeStruct((rp, LANES), jnp.float32),
            jax.ShapeDtypeStruct((rn, LANES), jnp.float32),
        ),
        grid=grid,
        in_specs=[
            pl.BlockSpec((6, LANES), lambda i: (0, 0)),        # coefficient planes
            pl.BlockSpec((ts, LANES), lambda i: (i, 0)),       # point tile
            pl.BlockSpec((3 * ts, LANES), lambda i: (i, 0)),   # neighbor tile
        ],
        out_specs=(
            pl.BlockSpec((ts, LANES), lambda i: (i, 0)),
            pl.BlockSpec((3 * ts, LANES), lambda i: (i, 0)),
        ),
        compiler_params=pltpu.CompilerParams(
            dimension_semantics=("parallel",)),                 # both TCs on v7x
    )(coef, pts2d, nbr2d)

    upd_flat = out_p2d.reshape(-1)
    nbr_out_flat = out_n2d.reshape(-1)
    if rp * LANES != Lp:
        upd_flat = upd_flat[:Lp]
    if rn * LANES != Ln:
        nbr_out_flat = nbr_out_flat[:Ln]

    update_points = upd_flat.reshape(-1, 3)      # (B*N, 3), free reshape
    neighbors_out = nbr_out_flat.reshape(-1, 9)  # (B*N, 9), free reshape
    return update_points, neighbors_out


if __name__ == "__main__":
    key = jax.random.PRNGKey(0)
    k1, k2, k3, k4 = jax.random.split(key, 4)

    # Deterministic parameter init (mirrors __init__ with rotation/translation=None)
    tp = jax.random.normal(k1, (3,), dtype=jnp.float32)
    tp = tp / jnp.linalg.norm(tp)
    tp_translation = jax.random.normal(k2, (3,), dtype=jnp.float32) * 0.001
    params = jnp.concatenate([0.001 * tp, tp_translation], axis=0)

    # Small example inputs: B=2, N=64 points, 3 neighbors per point.
    B, N = 2, 64
    points = jax.random.normal(k3, (B, N, 3), dtype=jnp.float32)
    points_neighbors = jax.random.normal(k4, (B, 3 * N, 3), dtype=jnp.float32)

    up, nb = jax.jit(reconstruction_point_forward)(params, points, points_neighbors)
    up = jax.block_until_ready(up)
    nb = jax.block_until_ready(nb)

    # Pure-JAX reference check.
    R, T = se3_exp3(params)
    ref_up = (points @ R + T.reshape(1, 1, 3)).reshape(-1, 3)
    ref_nb = (points_neighbors @ R + T.reshape(1, 1, 3)).reshape(-1, 9)
    assert up.shape == (B * N, 3) and nb.shape == (B * N, 9)
    assert jnp.allclose(up, ref_up, atol=1e-5)
    assert jnp.allclose(nb, ref_nb, atol=1e-5)

    print("KERNEL_OK")
</pallas_src>

<mosaic_0001>
module attributes {stable_mosaic.version = 11 : i64} {
  func.func @_rigid_kernel(%arg0: i32, %arg1: memref<6x384xf32, #tpu.memory_space<vmem>>, %arg2: memref<1x384xf32, #tpu.memory_space<vmem>>, %arg3: memref<3x384xf32, #tpu.memory_space<vmem>>, %arg4: memref<1x384xf32, #tpu.memory_space<vmem>>, %arg5: memref<3x384xf32, #tpu.memory_space<vmem>>) attributes {dimension_semantics = [#tpu.dimension_semantics<parallel>], iteration_bounds = array<i64: 1>, scalar_prefetch = 0 : i64, scratch_operands = 0 : i64, tpu.core_type = #tpu.core_type<tc>, window_params = [{pipeline_mode = #tpu.pipeline_mode<synchronous>, transform_indices = @transform_0, window_bounds = array<i64: 6, 384>}, {transform_indices = @transform_1, window_bounds = array<i64: 1, 384>}, {transform_indices = @transform_2, window_bounds = array<i64: 3, 384>}, {transform_indices = @transform_3, window_bounds = array<i64: 1, 384>}, {transform_indices = @transform_4, window_bounds = array<i64: 3, 384>}]} {
    %c0 = arith.constant 0 : index
    %c0_0 = arith.constant 0 : index
    %0 = vector.load %arg1[%c0, %c0_0] : memref<6x384xf32, #tpu.memory_space<vmem>>, vector<1x384xf32>
    %c1 = arith.constant 1 : index
    %c0_1 = arith.constant 0 : index
    %1 = vector.load %arg1[%c1, %c0_1] : memref<6x384xf32, #tpu.memory_space<vmem>>, vector<1x384xf32>
    %c2 = arith.constant 2 : index
    %c0_2 = arith.constant 0 : index
    %2 = vector.load %arg1[%c2, %c0_2] : memref<6x384xf32, #tpu.memory_space<vmem>>, vector<1x384xf32>
    %c3 = arith.constant 3 : index
    %c0_3 = arith.constant 0 : index
    %3 = vector.load %arg1[%c3, %c0_3] : memref<6x384xf32, #tpu.memory_space<vmem>>, vector<1x384xf32>
    %c4 = arith.constant 4 : index
    %c0_4 = arith.constant 0 : index
    %4 = vector.load %arg1[%c4, %c0_4] : memref<6x384xf32, #tpu.memory_space<vmem>>, vector<1x384xf32>
    %c5 = arith.constant 5 : index
    %c0_5 = arith.constant 0 : index
    %5 = vector.load %arg1[%c5, %c0_5] : memref<6x384xf32, #tpu.memory_space<vmem>>, vector<1x384xf32>
    %c0_6 = arith.constant 0 : index
    %c0_7 = arith.constant 0 : index
    %6 = vector.load %arg2[%c0_6, %c0_7] : memref<1x384xf32, #tpu.memory_space<vmem>>, vector<1x384xf32>
    %c1_i32 = arith.constant 1 : i32
    %7 = tpu.dynamic_rotate %6 by %c1_i32 dim 1 : vector<1x384xf32>, i32 -> vector<1x384xf32>
    %c2_i32 = arith.constant 2 : i32
    %8 = tpu.dynamic_rotate %6 by %c2_i32 dim 1 : vector<1x384xf32>, i32 -> vector<1x384xf32>
    %c383_i32 = arith.constant 383 : i32
    %9 = tpu.dynamic_rotate %6 by %c383_i32 dim 1 : vector<1x384xf32>, i32 -> vector<1x384xf32>
    %c382_i32 = arith.constant 382 : i32
    %10 = tpu.dynamic_rotate %6 by %c382_i32 dim 1 : vector<1x384xf32>, i32 -> vector<1x384xf32>
    %11 = arith.mulf %0, %8 : vector<1x384xf32>
    %12 = arith.mulf %1, %7 : vector<1x384xf32>
    %13 = arith.addf %11, %12 : vector<1x384xf32>
    %14 = arith.mulf %2, %6 : vector<1x384xf32>
    %15 = arith.addf %13, %14 : vector<1x384xf32>
    %16 = arith.mulf %3, %9 : vector<1x384xf32>
    %17 = arith.addf %15, %16 : vector<1x384xf32>
    %18 = arith.mulf %4, %10 : vector<1x384xf32>
    %19 = arith.addf %17, %18 : vector<1x384xf32>
    %20 = arith.addf %19, %5 : vector<1x384xf32>
    %c0_8 = arith.constant 0 : index
    %c0_9 = arith.constant 0 : index
    %21 = vector.load %arg4[%c0_8, %c0_9] : memref<1x384xf32, #tpu.memory_space<vmem>>, vector<1x384xf32>
    tpu.vector_store %arg4[%c0_8, %c0_9], %20 {strides = array<i32>} : memref<1x384xf32, #tpu.memory_space<vmem>>, vector<1x384xf32>,
    %c0_10 = arith.constant 0 : index
    %c0_11 = arith.constant 0 : index
    %22 = vector.load %arg3[%c0_10, %c0_11] : memref<3x384xf32, #tpu.memory_space<vmem>>, vector<3x384xf32>
    %c1_i32_12 = arith.constant 1 : i32
    %23 = tpu.dynamic_rotate %22 by %c1_i32_12 dim 1 : vector<3x384xf32>, i32 -> vector<3x384xf32>
    %c2_i32_13 = arith.constant 2 : i32
    %24 = tpu.dynamic_rotate %22 by %c2_i32_13 dim 1 : vector<3x384xf32>, i32 -> vector<3x384xf32>
    %c383_i32_14 = arith.constant 383 : i32
    %25 = tpu.dynamic_rotate %22 by %c383_i32_14 dim 1 : vector<3x384xf32>, i32 -> vector<3x384xf32>
    %c382_i32_15 = arith.constant 382 : i32
    %26 = tpu.dynamic_rotate %22 by %c382_i32_15 dim 1 : vector<3x384xf32>, i32 -> vector<3x384xf32>
    %27 = vector.broadcast %0 : vector<1x384xf32> to vector<3x384xf32>
    %28 = arith.mulf %27, %24 : vector<3x384xf32>
    %29 = vector.broadcast %1 : vector<1x384xf32> to vector<3x384xf32>
    %30 = arith.mulf %29, %23 : vector<3x384xf32>
    %31 = arith.addf %28, %30 : vector<3x384xf32>
    %32 = vector.broadcast %2 : vector<1x384xf32> to vector<3x384xf32>
    %33 = arith.mulf %32, %22 : vector<3x384xf32>
    %34 = arith.addf %31, %33 : vector<3x384xf32>
    %35 = vector.broadcast %3 : vector<1x384xf32> to vector<3x384xf32>
    %36 = arith.mulf %35, %25 : vector<3x384xf32>
    %37 = arith.addf %34, %36 : vector<3x384xf32>
    %38 = vector.broadcast %4 : vector<1x384xf32> to vector<3x384xf32>
    %39 = arith.mulf %38, %26 : vector<3x384xf32>
    %40 = arith.addf %37, %39 : vector<3x384xf32>
    %41 = vector.broadcast %5 : vector<1x384xf32> to vector<3x384xf32>
    %42 = arith.addf %40, %41 : vector<3x384xf32>
    %c0_16 = arith.constant 0 : index
    %c0_17 = arith.constant 0 : index
    %43 = vector.load %arg5[%c0_16, %c0_17] : memref<3x384xf32, #tpu.memory_space<vmem>>, vector<3x384xf32>
    tpu.vector_store %arg5[%c0_16, %c0_17], %42 {strides = array<i32>} : memref<3x384xf32, #tpu.memory_space<vmem>>, vector<3x384xf32>,
    return
  }
  func.func @transform_0(%arg0: i32) -> (i32, i32) {
    %c0_i32 = arith.constant 0 : i32
    %c0_i32_0 = arith.constant 0 : i32
    %c0_i32_1 = arith.constant 0 : i32
    return %c0_i32, %c0_i32_0 : i32, i32
  }
  func.func @transform_1(%arg0: i32) -> (i32, i32) {
    %c0_i32 = arith.constant 0 : i32
    %c0_i32_0 = arith.constant 0 : i32
    return %arg0, %c0_i32 : i32, i32
  }
  func.func @transform_2(%arg0: i32) -> (i32, i32) {
    %c0_i32 = arith.constant 0 : i32
    %c0_i32_0 = arith.constant 0 : i32
    return %arg0, %c0_i32 : i32, i32
  }
  func.func @transform_3(%arg0: i32) -> (i32, i32) {
    %c0_i32 = arith.constant 0 : i32
    %c0_i32_0 = arith.constant 0 : i32
    return %arg0, %c0_i32 : i32, i32
  }
  func.func @transform_4(%arg0: i32) -> (i32, i32) {
    %c0_i32 = arith.constant 0 : i32
    %c0_i32_0 = arith.constant 0 : i32
    return %arg0, %c0_i32 : i32, i32
  }
}

</mosaic_0001>

<llo_original>
// kernel: reconstruction_point_forward.1
$region0: #{reconstruction_point_forward.1}
  #allocation0 [shape = 'u32[]', space=smem, size = 0x4, offset = 0x4, fixed_abs, tag = 'smem constant byte address 0x4 - core index']
  #allocation1 [shape = 'u32[144,128]{1,0:T(1,128)}', space=vmem, size = 0x12000, scoped, tag = 'internal scratch']
  %s0 = inlined_call_operand.vmem [shape: f32[6,384], index: 0, kind: input, shape index: {}]
  %s1 = inlined_call_operand.vmem [shape: f32[1,384], index: 1, kind: input, shape index: {}]
  %s2 = inlined_call_operand.vmem [shape: f32[3,384], index: 2, kind: input, shape index: {}]
  %s3 = inlined_call_operand.vmem [shape: f32[1,384], index: 3, kind: output, shape index: {0}]
  %s4 = inlined_call_operand.vmem [shape: f32[3,384], index: 4, kind: output, shape index: {1}]
  %5 = xla_tuple %s3, %s4
  %s6 = sld [smem:[#allocation0]]
  $region30: #{reconstruction_point_forward.1} parent=0
    _
  %s8 = ssub.s32 1, %s6
  %s9 = scalar_select 0, %s8, %s6
  // Predicated region
  $region2: #{reconstruction_point_forward.1} parent=0 // pred_check
    _
  $region3: #{reconstruction_point_forward.1} parent=0 // pred_check_branch
    %11 = sbr.rel (0) target = $region5
  $region4: #{reconstruction_point_forward.1} parent=0 // pred_region
    _
  $region5: #{reconstruction_point_forward.1} parent=0 // pred_fallthru
    _
  // Predicated region
  $region6: #{reconstruction_point_forward.1} parent=0 // pred_check
    _
  $region7: #{reconstruction_point_forward.1} parent=0 // pred_check_branch
    %13 = sbr.rel (0) target = $region9
  $region8: #{reconstruction_point_forward.1} parent=0 // pred_region
    _
  $region9: #{reconstruction_point_forward.1} parent=0 // pred_fallthru
    _
  // Predicated region
  $region10: #{reconstruction_point_forward.1} parent=0 // pred_check
    _
  $region11: #{reconstruction_point_forward.1} parent=0 // pred_check_branch
    %15 = sbr.rel (0) target = $region13
  $region12: #{reconstruction_point_forward.1} parent=0 // pred_region
    _
  $region13: #{reconstruction_point_forward.1} parent=0 // pred_fallthru
    _
  %v16 = vld [vmem:[%s0] ss:$8 sm:$0x7]
  %s17 = scalar_lea.vmem %s0, 1
  %v18 = vld [vmem:[%s17] ss:$8 sm:$0x7]
  %s19 = scalar_lea.vmem %s0, 2
  %v20 = vld [vmem:[%s19] ss:$8 sm:$0x7]
  %s21 = scalar_lea.vmem %s0, 3
  %v22 = vld [vmem:[%s21] ss:$8 sm:$0x7]
  %s23 = scalar_lea.vmem %s0, 4
  %v24 = vld [vmem:[%s23] ss:$8 sm:$0x7]
  %s25 = scalar_lea.vmem %s0, 5
  %v26 = vld [vmem:[%s25] ss:$8 sm:$0x7]
  %v27 = vld [vmem:[%s1] sm:$0x7]
  %v29 = vlaneseq
  %v30 = vshrl.u32 %v29, 7
  %v31 = vsub.s32 0, %v30
  %v32 = vrot.slane %v27, %v31
  %v33 = vlaneseq
  %v34 = vshrl.u32 %v33, 7
  %v35 = vsub.s32 1, %v34
  %v36 = vrot.slane %v27, %v35
  %v37 = vlaneseq
  %v38 = vshrl.u32 %v37, 7
  %v39 = vsub.s32 2, %v38
  %v40 = vrot.slane %v27, %v39
  %44 = vrot.lane.b32.xlu0 %v32, 1
  %v45 = vpop.permute.xlu0 %44
  %46 = vrot.lane.b32.xlu0 %v36, 1
  %v47 = vpop.permute.xlu0 %46
  %48 = vrot.lane.b32.xlu0 %v40, 1
  %v49 = vpop.permute.xlu0 %48
  %v50 = vlaneseq
  %v51 = vand.u32 %v50, 127
  %vm52 = vcmp.lt.s32.totalorder %v51, 1
  %v53 = vsel %vm52, %v47, %v49
  %v54 = vsel %vm52, %v45, %v47
  %v55 = vsel %vm52, %v49, %v45
  %56 = vrot.lane.b32.xlu0 %v32, 2
  %v57 = vpop.permute.xlu0 %56
  %58 = vrot.lane.b32.xlu0 %v36, 2
  %v59 = vpop.permute.xlu0 %58
  %60 = vrot.lane.b32.xlu0 %v40, 2
  %v61 = vpop.permute.xlu0 %60
  %vm62 = vcmp.lt.s32.totalorder %v51, 2
  %v63 = vsel %vm62, %v59, %v61
  %v64 = vsel %vm62, %v57, %v59
  %v65 = vsel %vm62, %v61, %v57
  %66 = vrot.lane.b32.xlu0 %v32, 127
  %v67 = vpop.permute.xlu0 %66
  %68 = vrot.lane.b32.xlu0 %v36, 127
  %v69 = vpop.permute.xlu0 %68
  %70 = vrot.lane.b32.xlu0 %v40, 127
  %v71 = vpop.permute.xlu0 %70
  %vm72 = vcmp.lt.s32.totalorder %v51, 127
  %v73 = vsel %vm72, %v69, %v71
  %v74 = vsel %vm72, %v67, %v69
  %v75 = vsel %vm72, %v71, %v67
  %76 = vrot.lane.b32.xlu0 %v32, 126
  %v77 = vpop.permute.xlu0 %76
  %78 = vrot.lane.b32.xlu0 %v36, 126
  %v79 = vpop.permute.xlu0 %78
  %80 = vrot.lane.b32.xlu0 %v40, 126
  %v81 = vpop.permute.xlu0 %80
  %vm82 = vcmp.lt.s32.totalorder %v51, 126
  %v83 = vsel %vm82, %v79, %v81
  %v84 = vsel %vm82, %v77, %v79
  %v85 = vsel %vm82, %v81, %v77
  %v89 = vcombine.low %v65, %v64
  %v91 = vunpack.c.l.s4 1966171168
  %v92 = vunpack.c.0.s8 %v91
  %v93 = vlaneseq
  %v94 = vshrl.u32 %v93, 7
  %v95 = vsub.s32 %v92, %v94
  %v96 = vrot.slane %v89, %v95
  %v98 = vunpack.c.l.s4 1966171168
  %v99 = vunpack.c.0.s8 %v98
  %v100 = vlaneseq
  %v101 = vshrl.u32 %v100, 7
  %v102 = vsub.s32 %v99, %v101
  %v103 = vrot.slane %v63, %v102
  %v104 = vcombine.low %v96, %v103
  %v106 = vunpack.c.l.s4 1966171168
  %v107 = vunpack.c.0.s8 %v106
  %v108 = vlaneseq
  %v109 = vshrl.u32 %v108, 7
  %v110 = vsub.s32 %v107, %v109
  %v111 = vrot.slane %v104, %v110
  %v113 = vmul.f32 %v16, %v111
  %v117 = vcombine.low %v55, %v54
  %v119 = vunpack.c.l.s4 1966171168
  %v120 = vunpack.c.0.s8 %v119
  %v121 = vlaneseq
  %v122 = vshrl.u32 %v121, 7
  %v123 = vsub.s32 %v120, %v122
  %v124 = vrot.slane %v117, %v123
  %v126 = vunpack.c.l.s4 1966171168
  %v127 = vunpack.c.0.s8 %v126
  %v128 = vlaneseq
  %v129 = vshrl.u32 %v128, 7
  %v130 = vsub.s32 %v127, %v129
  %v131 = vrot.slane %v53, %v130
  %v132 = vcombine.low %v124, %v131
  %v134 = vunpack.c.l.s4 1966171168
  %v135 = vunpack.c.0.s8 %v134
  %v136 = vlaneseq
  %v137 = vshrl.u32 %v136, 7
  %v138 = vsub.s32 %v135, %v137
  %v139 = vrot.slane %v132, %v138
  %v141 = vmul.f32 %v18, %v139
  %v142 = vadd.f32 %v113, %v141
  %v143 = vmul.f32 %v20, %v27
  %v144 = vadd.f32 %v142, %v143
  %v148 = vcombine.low %v74, %v73
  %v150 = vunpack.c.l.s4 1966171168
  %v151 = vunpack.c.0.s8 %v150
  %v152 = vlaneseq
  %v153 = vshrl.u32 %v152, 7
  %v154 = vsub.s32 %v151, %v153
  %v155 = vrot.slane %v148, %v154
  %v157 = vunpack.c.l.s4 1966171168
  %v158 = vunpack.c.0.s8 %v157
  %v159 = vlaneseq
  %v160 = vshrl.u32 %v159, 7
  %v161 = vsub.s32 %v158, %v160
  %v162 = vrot.slane %v75, %v161
  %v163 = vcombine.low %v155, %v162
  %v165 = vunpack.c.l.s4 1966171168
  %v166 = vunpack.c.0.s8 %v165
  %v167 = vlaneseq
  %v168 = vshrl.u32 %v167, 7
  %v169 = vsub.s32 %v166, %v168
  %v170 = vrot.slane %v163, %v169
  %v172 = vmul.f32 %v22, %v170
  %v173 = vadd.f32 %v144, %v172
  %v177 = vcombine.low %v84, %v83
  %v179 = vunpack.c.l.s4 1966171168
  %v180 = vunpack.c.0.s8 %v179
  %v181 = vlaneseq
  %v182 = vshrl.u32 %v181, 7
  %v183 = vsub.s32 %v180, %v182
  %v184 = vrot.slane %v177, %v183
  %v186 = vunpack.c.l.s4 1966171168
  %v187 = vunpack.c.0.s8 %v186
  %v188 = vlaneseq
  %v189 = vshrl.u32 %v188, 7
  %v190 = vsub.s32 %v187, %v189
  %v191 = vrot.slane %v85, %v190
  %v192 = vcombine.low %v184, %v191
  %v194 = vunpack.c.l.s4 1966171168
  %v195 = vunpack.c.0.s8 %v194
  %v196 = vlaneseq
  %v197 = vshrl.u32 %v196, 7
  %v198 = vsub.s32 %v195, %v197
  %v199 = vrot.slane %v192, %v198
  %v201 = vmul.f32 %v24, %v199
  %v202 = vadd.f32 %v173, %v201
  %v203 = vadd.f32 %v202, %v26
  %v204 = vlaneseq
  %vm205 = vcmp.ge.s32.totalorder %v204, 0
  %vm206 = vcmp.lt.s32.totalorder %v204, 384
  %vm207 = vmand %vm205, %vm206
  %208 = vst.msk [vmem:[%s3] sm:$0x7] %vm207, %v203
  %v209 = vld [vmem:[%s2] sm:$0x77]
  %v210 = vld [vmem:[%s2 + $0x8] sm:$0x7]
  %v212 = vcombine.high %v209, %v209
  %214 = vrot.lane.b32.xlu0 %v209, 1
  %v215 = vpop.permute.xlu0 %214
  %216 = vrot.lane.b32.xlu0 %v212, 1
  %v217 = vpop.permute.xlu0 %216
  %218 = vrot.lane.b32.xlu0 %v210, 1
  %v219 = vpop.permute.xlu0 %218
  %v220 = vsel %vm52, %v217, %v219
  %v221 = vsel %vm52, %v215, %v217
  %v222 = vsel %vm52, %v219, %v215
  %223 = vrot.lane.b32.xlu0 %v209, 2
  %v224 = vpop.permute.xlu0 %223
  %225 = vrot.lane.b32.xlu0 %v212, 2
  %v226 = vpop.permute.xlu0 %225
  %227 = vrot.lane.b32.xlu0 %v210, 2
  %v228 = vpop.permute.xlu0 %227
  %v229 = vsel %vm62, %v226, %v228
  %v230 = vsel %vm62, %v224, %v226
  %v231 = vsel %vm62, %v228, %v224
  %232 = vrot.lane.b32.xlu0 %v209, 127
  %v233 = vpop.permute.xlu0 %232
  %234 = vrot.lane.b32.xlu0 %v212, 127
  %v235 = vpop.permute.xlu0 %234
  %236 = vrot.lane.b32.xlu0 %v210, 127
  %v237 = vpop.permute.xlu0 %236
  %v238 = vsel %vm72, %v235, %v237
  %v239 = vsel %vm72, %v233, %v235
  %v240 = vsel %vm72, %v237, %v233
  %241 = vrot.lane.b32.xlu0 %v209, 126
  %v242 = vpop.permute.xlu0 %241
  %243 = vrot.lane.b32.xlu0 %v212, 126
  %v244 = vpop.permute.xlu0 %243
  %245 = vrot.lane.b32.xlu0 %v210, 126
  %v246 = vpop.permute.xlu0 %245
  %v247 = vsel %vm82, %v244, %v246
  %v248 = vsel %vm82, %v242, %v244
  %v249 = vsel %vm82, %v246, %v242
  %v251 = vlaneseq
  %v252 = vshrl.u32 %v251, 7
  %v253 = vsub.s32 0, %v252
  %v254 = vrot.slane %v16, %v253
  %v255 = vlaneseq
  %v256 = vshrl.u32 %v255, 7
  %v257 = vsub.s32 1, %v256
  %v258 = vrot.slane %v16, %v257
  %v259 = vlaneseq
  %v260 = vshrl.u32 %v259, 7
  %v261 = vsub.s32 2, %v260
  %v262 = vrot.slane %v16, %v261
  %v266 = vmul.f32 %v254, %v231
  %v267 = vmul.f32 %v258, %v230
  %v268 = vmul.f32 %v262, %v229
  %v270 = vlaneseq
  %v271 = vshrl.u32 %v270, 7
  %v272 = vsub.s32 0, %v271
  %v273 = vrot.slane %v18, %v272
  %v274 = vlaneseq
  %v275 = vshrl.u32 %v274, 7
  %v276 = vsub.s32 1, %v275
  %v277 = vrot.slane %v18, %v276
  %v278 = vlaneseq
  %v279 = vshrl.u32 %v278, 7
  %v280 = vsub.s32 2, %v279
  %v281 = vrot.slane %v18, %v280
  %v285 = vmul.f32 %v273, %v222
  %v286 = vmul.f32 %v277, %v221
  %v287 = vmul.f32 %v281, %v220
  %v288 = vadd.f32 %v266, %v285
  %v289 = vadd.f32 %v267, %v286
  %v290 = vadd.f32 %v268, %v287
  %v292 = vlaneseq
  %v293 = vshrl.u32 %v292, 7
  %v294 = vsub.s32 0, %v293
  %v295 = vrot.slane %v20, %v294
  %v296 = vlaneseq
  %v297 = vshrl.u32 %v296, 7
  %v298 = vsub.s32 1, %v297
  %v299 = vrot.slane %v20, %v298
  %v300 = vlaneseq
  %v301 = vshrl.u32 %v300, 7
  %v302 = vsub.s32 2, %v301
  %v303 = vrot.slane %v20, %v302
  %v307 = vmul.f32 %v295, %v209
  %v308 = vmul.f32 %v299, %v212
  %v309 = vmul.f32 %v303, %v210
  %v310 = vadd.f32 %v288, %v307
  %v311 = vadd.f32 %v289, %v308
  %v312 = vadd.f32 %v290, %v309
  %v314 = vlaneseq
  %v315 = vshrl.u32 %v314, 7
  %v316 = vsub.s32 0, %v315
  %v317 = vrot.slane %v22, %v316
  %v318 = vlaneseq
  %v319 = vshrl.u32 %v318, 7
  %v320 = vsub.s32 1, %v319
  %v321 = vrot.slane %v22, %v320
  %v322 = vlaneseq
  %v323 = vshrl.u32 %v322, 7
  %v324 = vsub.s32 2, %v323
  %v325 = vrot.slane %v22, %v324
  %v329 = vmul.f32 %v317, %v239
  %v330 = vmul.f32 %v321, %v238
  %v331 = vmul.f32 %v325, %v240
  %v332 = vadd.f32 %v310, %v329
  %v333 = vadd.f32 %v311, %v330
  %v334 = vadd.f32 %v312, %v331
  %v336 = vlaneseq
  %v337 = vshrl.u32 %v336, 7
  %v338 = vsub.s32 0, %v337
  %v339 = vrot.slane %v24, %v338
  %v340 = vlaneseq
  %v341 = vshrl.u32 %v340, 7
  %v342 = vsub.s32 1, %v341
  %v343 = vrot.slane %v24, %v342
  %v344 = vlaneseq
  %v345 = vshrl.u32 %v344, 7
  %v346 = vsub.s32 2, %v345
  %v347 = vrot.slane %v24, %v346
  %v351 = vmul.f32 %v339, %v248
  %v352 = vmul.f32 %v343, %v247
  %v353 = vmul.f32 %v347, %v249
  %v354 = vadd.f32 %v332, %v351
  %v355 = vadd.f32 %v333, %v352
  %v356 = vadd.f32 %v334, %v353
  %v358 = vlaneseq
  %v359 = vshrl.u32 %v358, 7
  %v360 = vsub.s32 0, %v359
  %v361 = vrot.slane %v26, %v360
  %v362 = vlaneseq
  %v363 = vshrl.u32 %v362, 7
  %v364 = vsub.s32 1, %v363
  %v365 = vrot.slane %v26, %v364
  %v366 = vlaneseq
  %v367 = vshrl.u32 %v366, 7
  %v368 = vsub.s32 2, %v367
  %v369 = vrot.slane %v26, %v368
  %v373 = vadd.f32 %v354, %v361
  %v374 = vadd.f32 %v355, %v365
  %v375 = vadd.f32 %v356, %v369
  %v378 = vcombine.low %v373, %v374
  %380 = vst [vmem:[%s4] sm:$0x77] %v378
  %381 = vst [vmem:[%s4 + $0x8] sm:$0x7] %v375
  // Predicated region
  $region14: #{reconstruction_point_forward.1} parent=0 // pred_check
    _
  $region15: #{reconstruction_point_forward.1} parent=0 // pred_check_branch
    %383 = sbr.rel (0) target = $region17
  $region16: #{reconstruction_point_forward.1} parent=0 // pred_region
    _
  $region17: #{reconstruction_point_forward.1} parent=0 // pred_fallthru
    _
  // Predicated region
  $region18: #{reconstruction_point_forward.1} parent=0 // pred_check
    _
  $region19: #{reconstruction_point_forward.1} parent=0 // pred_check_branch
    %385 = sbr.rel (0) target = $region21
  $region20: #{reconstruction_point_forward.1} parent=0 // pred_region
    _
  $region21: #{reconstruction_point_forward.1} parent=0 // pred_fallthru
    _
  // Predicated region
  $region22: #{reconstruction_point_forward.1} parent=0 // pred_check
    _
  $region23: #{reconstruction_point_forward.1} parent=0 // pred_check_branch
    %387 = sbr.rel (0) target = $region25
  $region24: #{reconstruction_point_forward.1} parent=0 // pred_region
    _
  $region25: #{reconstruction_point_forward.1} parent=0 // pred_fallthru
    _
  // Predicated region
  $region26: #{reconstruction_point_forward.1} parent=0 // pred_check
    _
  $region27: #{reconstruction_point_forward.1} parent=0 // pred_check_branch
    %389 = sbr.rel (0) target = $region29
  $region28: #{reconstruction_point_forward.1} parent=0 // pred_region
    _
  $region29: #{reconstruction_point_forward.1} parent=0 // pred_fallthru
    _

</llo_original>
